<compile_context>
chip_gen: v7x
topology: tpu7x:2x2x1
jax: 0.10.0
libtpu: 0.0.40
codegen_flags: <defaults>
</compile_context>

<pallas_src>
import jax
import jax.numpy as jnp
from jax.experimental import pallas as pl
from jax.experimental.pallas import tpu as pltpu


def _round_up(x, m):
    return (x + m - 1) // m * m


def _mlp_kernel(x_ref, w_ref, b_ref, o_ref):
    # x_ref: (C, TN)  w_ref: (C, E)  b_ref: (1, E)  o_ref: (TN, E)
    acc = jax.lax.dot_general(
        x_ref[...], w_ref[...],
        dimension_numbers=(((0,), (0,)), ((), ())),   # contract C -> (TN, E)
        preferred_element_type=jnp.float32,
    )
    o_ref[...] = (acc + b_ref[...]).astype(o_ref.dtype)


def mlp_forward(x_nchw, weight, bias, *, compute_dtype=None, out_dtype=None,
                vmem_budget_bytes=40 << 20):
    """Pallas implementation of SegFormer MLP.forward.

    x_nchw : (B, C, H, W)   weight : (E, C) (PyTorch Linear layout)   bias : (E,)
    returns: (B, H*W, E)
    """
    B, C, H, W = x_nchw.shape
    E = weight.shape[0]
    N = H * W

    compute_dtype = compute_dtype or x_nchw.dtype
    out_dtype = out_dtype or x_nchw.dtype

    # (B, C, N): contiguous reshape of NCHW — no HBM-level transpose of x.
    x_bcn = x_nchw.reshape(B, C, N).astype(compute_dtype)
    w_ce = jnp.transpose(weight, (1, 0)).astype(compute_dtype)   # (C, E), tiny vs x
    b_2d = bias.reshape(1, E).astype(jnp.float32)                # bias add stays f32

    # Lane/sublane alignment (real SegFormer dims are already aligned -> no-op).
    C_pad = _round_up(C, 8)
    E_pad = _round_up(E, 128)
    if C_pad != C:
        x_bcn = jnp.pad(x_bcn, ((0, 0), (0, C_pad - C), (0, 0)))
        w_ce = jnp.pad(w_ce, ((0, C_pad - C), (0, 0)))
    if E_pad != E:
        w_ce = jnp.pad(w_ce, ((0, 0), (0, E_pad - E)))
        b_2d = jnp.pad(b_2d, ((0, 0), (0, E_pad - E)))

    in_bytes = jnp.dtype(compute_dtype).itemsize
    out_bytes = jnp.dtype(out_dtype).itemsize
    w_vmem = C_pad * E_pad * in_bytes

    # Largest 128-aligned token tile that divides N and fits the VMEM budget
    # (2x double-buffered x tile + 2x out tile + resident weight).
    TN = N   # fallback: full N ("full array dim" exemption, small inputs)
    for cand in (4096, 2048, 1024, 512, 256, 128):
        if N % cand:
            continue
        tile_vmem = 2 * cand * C_pad * in_bytes + 2 * cand * E_pad * out_bytes
        if w_vmem + tile_vmem <= vmem_budget_bytes:
            TN = cand
            break
    n_tiles = N // TN
    # TODO(synk): if N is huge and has no 128-aligned divisor, pad N as well.

    cost = pl.CostEstimate(
        flops=2 * B * N * C_pad * E_pad,
        transcendentals=0,
        bytes_accessed=(B * N * C_pad + C_pad * E_pad + E_pad) * in_bytes
                       + B * N * E_pad * out_bytes,
    )

    out = pl.pallas_call(
        _mlp_kernel,
        out_shape=jax.ShapeDtypeStruct((B, N, E_pad), out_dtype),
        grid_spec=pltpu.PrefetchScalarGridSpec(
            num_scalar_prefetch=0,
            grid=(B, n_tiles),
            in_specs=[
                # x tile: (C, TN), batch dim squeezed out of the kernel view.
                pl.BlockSpec((pl.Squeezed(), C_pad, TN), lambda b, n: (b, 0, n)),
                # weight / bias: constant index_map -> stay resident in VMEM.
                pl.BlockSpec((C_pad, E_pad), lambda b, n: (0, 0)),
                pl.BlockSpec((1, E_pad), lambda b, n: (0, 0)),
            ],
            out_specs=pl.BlockSpec((pl.Squeezed(), TN, E_pad),
                                   lambda b, n: (b, n, 0)),
        ),
        compiler_params=pltpu.CompilerParams(
            dimension_semantics=("parallel", "parallel"),
            vmem_limit_bytes=48 << 20,   # < 64 MiB physical on v7x
        ),
        cost_estimate=cost,
    )(x_bcn, w_ce, b_2d)

    if E_pad != E:
        out = out[..., :E]
    return out


def init_params(key, input_dim, embed_dim):
    """trunc_normal_(std=0.02) weight, zero bias — mirrors the PyTorch init."""
    kw, _ = jax.random.split(key)
    weight = 0.02 * jax.random.truncated_normal(
        kw, -2.0, 2.0, (embed_dim, input_dim), dtype=jnp.float32)
    bias = jnp.zeros((embed_dim,), dtype=jnp.float32)
    return weight, bias


if __name__ == "__main__":
    key = jax.random.PRNGKey(0)
    k_x, k_p = jax.random.split(key)

    # Small shapes consistent with the module (input_dim -> embed_dim projection).
    B, C, H, W = 2, 32, 16, 32      # input_dim = 32, N = 512 tokens
    E = 64                          # embed_dim = 64 (exercises E->128 padding)

    x = jax.random.normal(k_x, (B, C, H, W), dtype=jnp.float32)
    weight, bias = init_params(k_p, input_dim=C, embed_dim=E)

    # Reference (same math as the PyTorch forward).
    x_bnc = jnp.transpose(x.reshape(B, C, H * W), (0, 2, 1))
    ref = x_bnc @ weight.T + bias

    # 1) f32 path, default (single-N-tile-sized) tiling.
    out = jax.block_until_ready(mlp_forward(x, weight, bias))
    assert out.shape == (B, H * W, E)
    assert jnp.allclose(out, ref, atol=1e-5, rtol=1e-5)

    # 2) f32 path with a tiny VMEM budget -> forces TN=128, multi-tile grid,
    #    validating the tiled index maps.
    out_tiled = jax.block_until_ready(
        mlp_forward(x, weight, bias, vmem_budget_bytes=200 * 1024))
    assert jnp.allclose(out_tiled, ref, atol=1e-5, rtol=1e-5)

    # 3) bf16 compute path (f32 accumulation, f32 output) per perf review.
    out_bf16 = jax.block_until_ready(
        mlp_forward(x, weight, bias, compute_dtype=jnp.bfloat16))
    assert jnp.allclose(out_bf16, ref, atol=2e-2, rtol=5e-2)

    print("KERNEL_OK")
</pallas_src>

<mosaic_0001>
module attributes {stable_mosaic.version = 11 : i64} {
  func.func @_mlp_kernel(%arg0: i32, %arg1: i32, %arg2: memref<1x32x512xf32, #tpu.memory_space<vmem>>, %arg3: memref<32x128xf32, #tpu.memory_space<vmem>>, %arg4: memref<1x128xf32, #tpu.memory_space<vmem>>, %arg5: memref<1x512x128xf32, #tpu.memory_space<vmem>>) attributes {dimension_semantics = [#tpu.dimension_semantics<parallel>, #tpu.dimension_semantics<parallel>], iteration_bounds = array<i64: 2, 1>, scalar_prefetch = 0 : i64, scratch_operands = 0 : i64, tpu.core_type = #tpu.core_type<tc>, window_params = [{transform_indices = @transform_0, window_bounds = array<i64: 1, 32, 512>}, {pipeline_mode = #tpu.pipeline_mode<synchronous>, transform_indices = @transform_1, window_bounds = array<i64: 32, 128>}, {pipeline_mode = #tpu.pipeline_mode<synchronous>, transform_indices = @transform_2, window_bounds = array<i64: 1, 128>}, {transform_indices = @transform_3, window_bounds = array<i64: 1, 512, 128>}]} {
    %c0 = arith.constant 0 : index
    %c0_0 = arith.constant 0 : index
    %c0_1 = arith.constant 0 : index
    %0 = vector.load %arg2[%c0, %c0_0, %c0_1] : memref<1x32x512xf32, #tpu.memory_space<vmem>>, vector<1x32x512xf32>
    %1 = vector.shape_cast %0 : vector<1x32x512xf32> to vector<32x512xf32>
    %c0_2 = arith.constant 0 : index
    %c0_3 = arith.constant 0 : index
    %2 = vector.load %arg3[%c0_2, %c0_3] : memref<32x128xf32, #tpu.memory_space<vmem>>, vector<32x128xf32>
    %cst = arith.constant dense<0.000000e+00> : vector<512x128xf32>
    %3 = tpu.matmul %1, %2, %cst {dimension_numbers = #tpu.dot_dimension_numbers<[0], [0], [1], [1], [0, 1, 1, 1], [], []>} : vector<32x512xf32>, vector<32x128xf32>, vector<512x128xf32> -> vector<512x128xf32>
    %c0_4 = arith.constant 0 : index
    %c0_5 = arith.constant 0 : index
    %4 = vector.load %arg4[%c0_4, %c0_5] : memref<1x128xf32, #tpu.memory_space<vmem>>, vector<1x128xf32>
    %5 = vector.broadcast %4 : vector<1x128xf32> to vector<512x128xf32>
    %6 = arith.addf %3, %5 : vector<512x128xf32>
    %c0_6 = arith.constant 0 : index
    %c0_7 = arith.constant 0 : index
    %c0_8 = arith.constant 0 : index
    %7 = vector.load %arg5[%c0_6, %c0_7, %c0_8] : memref<1x512x128xf32, #tpu.memory_space<vmem>>, vector<1x512x128xf32>
    %8 = vector.shape_cast %7 : vector<1x512x128xf32> to vector<512x128xf32>
    %9 = vector.shape_cast %6 : vector<512x128xf32> to vector<1x512x128xf32>
    tpu.vector_store %arg5[%c0_6, %c0_7, %c0_8], %9 {strides = array<i32>} : memref<1x512x128xf32, #tpu.memory_space<vmem>>, vector<1x512x128xf32>,
    return
  }
  func.func @transform_0(%arg0: i32, %arg1: i32) -> (i32, i32, i32) {
    %c0_i32 = arith.constant 0 : i32
    %c0_i32_0 = arith.constant 0 : i32
    return %arg0, %c0_i32, %arg1 : i32, i32, i32
  }
  func.func @transform_1(%arg0: i32, %arg1: i32) -> (i32, i32) {
    %c0_i32 = arith.constant 0 : i32
    %c0_i32_0 = arith.constant 0 : i32
    %c0_i32_1 = arith.constant 0 : i32
    return %c0_i32, %c0_i32_0 : i32, i32
  }
  func.func @transform_2(%arg0: i32, %arg1: i32) -> (i32, i32) {
    %c0_i32 = arith.constant 0 : i32
    %c0_i32_0 = arith.constant 0 : i32
    %c0_i32_1 = arith.constant 0 : i32
    return %c0_i32, %c0_i32_0 : i32, i32
  }
  func.func @transform_3(%arg0: i32, %arg1: i32) -> (i32, i32, i32) {
    %c0_i32 = arith.constant 0 : i32
    %c0_i32_0 = arith.constant 0 : i32
    return %arg0, %arg1, %c0_i32 : i32, i32, i32
  }
}

</mosaic_0001>

<llo_original>
// kernel: tpu_custom_call.1
$region0: #{tpu_custom_call.1}
  #allocation0 [shape = 'u32[]', space=smem, size = 0x4, offset = 0x4, fixed_abs, tag = 'smem constant byte address 0x4 - core index']
  #allocation1 [shape = 'u32[144,128]{1,0:T(1,128)}', space=vmem, size = 0x12000, scoped, tag = 'internal scratch']
  %s0 = inlined_call_operand.hbm [shape: f32[2,32,512], index: 0, kind: input, shape index: {}]
  %s1 = inlined_call_operand.hbm [shape: f32[32,128], index: 1, kind: input, shape index: {}]
  %s2 = inlined_call_operand.vmem [shape: f32[1,128], index: 2, kind: input, shape index: {}]
  %s3 = inlined_call_operand.hbm [shape: f32[2,512,128], index: 3, kind: output, shape index: {}]
  %s4 = sld [smem:[#allocation0]]
  $region53: #{tpu_custom_call.1} parent=0
    _
  %s6 = ssub.s32 1, %s4
  %s7 = scalar_select 0, %s6, %s4
  $region1: #{tpu_custom_call.1} parent=0
    #allocation2 [shape = 'u8[131072]{0}', space=vmem, size = 0x20000, scoped, tag = 'input window, operand 0']
    #allocation3 [shape = 's32[2]{0}', space=sflag, size = 0x8, scoped, tag = 'scoped memory for tpu_custom_call.1']
    #allocation4 [shape = 's32[2]{0}', space=sflag, size = 0x8, scoped, tag = 'scoped memory for tpu_custom_call.1']
    #allocation5 [shape = 'u8[16384]{0}', space=vmem, size = 0x4000, scoped, tag = 'input window, operand 1, single buffered']
    #allocation6 [shape = 's32[1]{0}', space=sflag, size = 0x4, scoped, tag = 'scoped memory for tpu_custom_call.1']
    #allocation7 [shape = 'u8[524288]{0}', space=vmem, size = 0x80000, scoped, tag = 'output window, operand 0']
    %8 = vsyncpa [#allocation3], 0
    %s9 = scalar_lea.sflag [#allocation3], 1
    %10 = vsyncpa %s9, 0
    %11 = vsyncpa [#allocation6], 0
    %12 = vsyncpa [#allocation4], 0
    %s13 = scalar_lea.sflag [#allocation4], 1
    %14 = vsyncpa %s13, 0
    loop: start=0, step=1, limit=4
    $region2: #{tpu_custom_call.1} parent=1 // loop_pre_header
      _
    $region3: #{tpu_custom_call.1} parent=1 // loop_header
      %s16 = sphi 0, %s20
      %p17 = scmp.ge.s32.totalorder %s16, 4
      %s23 = sphi 0, %s35
      %s24 = sphi 0, %s31
      %s25 = sphi 0, %s23
      %s26 = sphi 0, %s24
      %s27 = sphi 0, %s25
      %s28 = sphi 0, %s26
      %s40 = sphi 0, %s42
      %s43 = sphi 0, %s40
      %s44 = sphi 0, %s43
      %s60 = sphi 0, %s44
      %s64 = sphi 0, %s64
      %s66 = sphi 0, %s64
      %s67 = sphi 0, %s66
      %s81 = sphi 0, %s67
      %s85 = sphi 0, %s85
      %s87 = sphi 0, %s85
      %s88 = sphi 0, %s87
      %s102 = sphi 0, %s88
      %s110 = sphi 0, %s112
      %s113 = sphi 0, %s110
      %s114 = sphi 0, %s113
      %s130 = sphi 0, %s114
    $region4: #{tpu_custom_call.1} parent=1 // loop_header_branch
      %19 = sbr.rel (%p17) target = $region8
    $region5: #{tpu_custom_call.1} parent=1 // loop_body
      %s21 = ssub.s32 %s16, 1
      %s22 = ssub.s32 %s16, 2
      %s29 = sadd.s32 1, %s24
      %p30 = scmp.ge.s32.totalorder %s29, 1
      %s31 = scalar_select %p30, 0, %s29
      %s32 = sadd.s32 1, %s23
      %s33 = scalar_select %p30, %s32, %s23
      %p34 = scmp.ge.s32.totalorder %s33, 2
      %s35 = scalar_select %p34, 0, %s33
      %s36 = ssub.s32 %s23, %s35
      %s37 = ssub.s32 %s24, %s31
      %s38 = sor.u32 %s36, %s37
      %p39 = scmp.eq.s32.totalorder %s38, 0
      %s41 = sadd.s32 %s40, 1
      %s42 = scalar_select %p39, %s40, %s41
      %p45 = pneg %p39
      %p46 = scmp.eq.s32.totalorder %s16, 1
      %p47 = por %p45, %p46
      %p48 = scmp.ne.s32.totalorder %s40, %s43
      %p49 = scmp.eq.s32.totalorder %s16, 0
      %p50 = por %p48, %p49
      %p51 = scmp.ne.s32.totalorder %s40, %s43
      %p52 = scmp.eq.s32.totalorder %s21, 1
      %p53 = por %p51, %p52
      %p54 = scmp.ne.s32.totalorder %s43, %s44
      %p55 = scmp.eq.s32.totalorder %s21, 0
      %p56 = por %p54, %p55
      %p57 = scmp.ne.s32.totalorder %s43, %s44
      %p58 = scmp.eq.s32.totalorder %s22, 1
      %p59 = por %p57, %p58
      %p61 = scmp.ne.s32.totalorder %s44, %s60
      %p62 = scmp.eq.s32.totalorder %s22, 0
      %p63 = por %p61, %p62
      %s65 = sadd.s32 %s64, 1
      %p68 = scmp.eq.s32.totalorder %s16, 1
      %p69 = scmp.ne.s32.totalorder %s64, %s66
      %p70 = scmp.eq.s32.totalorder %s16, 0
      %p71 = por %p69, %p70
      %p72 = scmp.ne.s32.totalorder %s64, %s66
      %p73 = scmp.eq.s32.totalorder %s21, 1
      %p74 = por %p72, %p73
      %p75 = scmp.ne.s32.totalorder %s66, %s67
      %p76 = scmp.eq.s32.totalorder %s21, 0
      %p77 = por %p75, %p76
      %p78 = scmp.ne.s32.totalorder %s66, %s67
      %p79 = scmp.eq.s32.totalorder %s22, 1
      %p80 = por %p78, %p79
      %p82 = scmp.ne.s32.totalorder %s67, %s81
      %p83 = scmp.eq.s32.totalorder %s22, 0
      %p84 = por %p82, %p83
      %s86 = sadd.s32 %s85, 1
      %p89 = scmp.eq.s32.totalorder %s16, 1
      %p90 = scmp.ne.s32.totalorder %s85, %s87
      %p91 = scmp.eq.s32.totalorder %s16, 0
      %p92 = por %p90, %p91
      %p93 = scmp.ne.s32.totalorder %s85, %s87
      %p94 = scmp.eq.s32.totalorder %s21, 1
      %p95 = por %p93, %p94
      %p96 = scmp.ne.s32.totalorder %s87, %s88
      %p97 = scmp.eq.s32.totalorder %s21, 0
      %p98 = por %p96, %p97
      %p99 = scmp.ne.s32.totalorder %s87, %s88
      %p100 = scmp.eq.s32.totalorder %s22, 1
      %p101 = por %p99, %p100
      %p103 = scmp.ne.s32.totalorder %s88, %s102
      %p104 = scmp.eq.s32.totalorder %s22, 0
      %p105 = por %p103, %p104
      %s106 = ssub.s32 %s23, %s35
      %s107 = ssub.s32 %s24, %s31
      %s108 = sor.u32 %s106, %s107
      %p109 = scmp.eq.s32.totalorder %s108, 0
      %s111 = sadd.s32 %s110, 1
      %s112 = scalar_select %p109, %s110, %s111
      %p115 = pneg %p109
      %p116 = scmp.eq.s32.totalorder %s16, 1
      %p117 = por %p115, %p116
      %p118 = scmp.ne.s32.totalorder %s110, %s113
      %p119 = scmp.eq.s32.totalorder %s16, 0
      %p120 = por %p118, %p119
      %p121 = scmp.ne.s32.totalorder %s110, %s113
      %p122 = scmp.eq.s32.totalorder %s21, 1
      %p123 = por %p121, %p122
      %p124 = scmp.ne.s32.totalorder %s113, %s114
      %p125 = scmp.eq.s32.totalorder %s21, 0
      %p126 = por %p124, %p125
      %p127 = scmp.ne.s32.totalorder %s113, %s114
      %p128 = scmp.eq.s32.totalorder %s22, 1
      %p129 = por %p127, %p128
      %p131 = scmp.ne.s32.totalorder %s114, %s130
      %p132 = scmp.eq.s32.totalorder %s22, 0
      %p133 = por %p131, %p132
      %p134 = scmp.le.s32.totalorder 1, %s16
      %p135 = scmp.lt.s32.totalorder %s16, 3
      %p136 = pnand %p134, %p135
      %p137 = pneg %p136
      // Predicated region
      $region9: #{tpu_custom_call.1} parent=5 // pred_check
        _
      $region10: #{tpu_custom_call.1} parent=5 // pred_check_branch
        %139 = sbr.rel (%p136) target = $region12
      $region11: #{tpu_custom_call.1} parent=5 // pred_region
        %s140 = ssub.s32 %s16, 1
        // Predicated region
        $region13: #{tpu_custom_call.1} parent=11 // pred_check
          %p141 = pneg %p77
        $region14: #{tpu_custom_call.1} parent=11 // pred_check_branch
          %143 = sbr.rel (%p141) target = $region16
        $region15: #{tpu_custom_call.1} parent=11 // pred_region
          %s145 = ssub.s32 512, 512
          %146 = vsyncadd [#allocation6], %s145
          %s147 = sshll.u32 [#allocation5], 4
          %s148 = int_to_ptr.vmem [resolvable:$true] %s147
          %153 = dma.hbm_to_vmem [thread:$0]  %s1, 512, %s148, [#allocation6], 128, 128, 8
        $region16: #{tpu_custom_call.1} parent=11 // pred_fallthru
          _
        // Predicated region
        $region17: #{tpu_custom_call.1} parent=11 // pred_check
          %p154 = pneg %p98
        $region18: #{tpu_custom_call.1} parent=11 // pred_check_branch
          %156 = sbr.rel (%p154) target = $region20
        $region19: #{tpu_custom_call.1} parent=11 // pred_region
          _
        $region20: #{tpu_custom_call.1} parent=11 // pred_fallthru
          _
      $region12: #{tpu_custom_call.1} parent=5 // pred_fallthru
        _
      %p157 = scmp.lt.s32.totalorder %s16, 2
      // Predicated region
      $region21: #{tpu_custom_call.1} parent=5 // pred_check
        %p158 = pneg %p157
      $region22: #{tpu_custom_call.1} parent=5 // pred_check_branch
        %160 = sbr.rel (%p158) target = $region24
      $region23: #{tpu_custom_call.1} parent=5 // pred_region
        // Predicated region
        $region25: #{tpu_custom_call.1} parent=23 // pred_check
          %p161 = pneg %p50
        $region26: #{tpu_custom_call.1} parent=23 // pred_check_branch
          %163 = sbr.rel (%p161) target = $region28
        $region27: #{tpu_custom_call.1} parent=23 // pred_region
          %s164 = sand.u32 %s40, 1
          %s165 = scalar_lea.sflag [#allocation3], %s164
          %s166 = sand.u32 %s40, 1
          %s167 = smul.addr %s166, 128
          %s168 = scalar_lea.vmem [#allocation2], %s167
          %s169 = smul.u32 4, %s24
          %s171 = ssub.s32 2048, 2048
          %172 = vsyncadd %s165, %s171
          %s173 = smul.addr %s23, 16
          %s174 = sadd.s32 %s169, %s173
          %s175 = smul.addr %s174, 128
          %s176 = scalar_lea.hbm %s0, %s175
          %s177 = sshll.u32 %s168, 4
          %s178 = int_to_ptr.vmem [resolvable:$true] %s177
          %183 = dma.hbm_to_vmem [thread:$0]  %s176, 2048, %s178, %s165, 512, 512, 32
        $region28: #{tpu_custom_call.1} parent=23 // pred_fallthru
          _
      $region24: #{tpu_custom_call.1} parent=5 // pred_fallthru
        _
      %p184 = scmp.le.s32.totalorder 1, %s16
      %p185 = scmp.lt.s32.totalorder %s16, 3
      %p186 = pnand %p184, %p185
      %p187 = pneg %p186
      // Predicated region
      $region29: #{tpu_custom_call.1} parent=5 // pred_check
        _
      $region30: #{tpu_custom_call.1} parent=5 // pred_check_branch
        %189 = sbr.rel (%p186) target = $region32
      $region31: #{tpu_custom_call.1} parent=5 // pred_region
        %s190 = ssub.s32 %s16, 1
        %s191 = sand.u32 %s43, 1
        %s192 = scalar_lea.sflag [#allocation3], %s191
        %s193 = sand.u32 %s43, 1
        %s194 = smul.addr %s193, 128
        %s195 = scalar_lea.vmem [#allocation2], %s194
        // Predicated region
        $region33: #{tpu_custom_call.1} parent=31 // pred_check
          %p196 = pneg %p56
        $region34: #{tpu_custom_call.1} parent=31 // pred_check_branch
          %198 = sbr.rel (%p196) target = $region36
        $region35: #{tpu_custom_call.1} parent=31 // pred_region
          %199 = dma.done %s192, 2048
        $region36: #{tpu_custom_call.1} parent=31 // pred_fallthru
          _
        // Predicated region
        $region37: #{tpu_custom_call.1} parent=31 // pred_check
          %p200 = pneg %p77
        $region38: #{tpu_custom_call.1} parent=31 // pred_check_branch
          %202 = sbr.rel (%p200) target = $region40
        $region39: #{tpu_custom_call.1} parent=31 // pred_region
          %203 = dma.done [#allocation6], 512
        $region40: #{tpu_custom_call.1} parent=31 // pred_fallthru
          _
        %s204 = sand.u32 %s43, 1
        %s205 = scalar_lea.sflag [#allocation3], %s204
        %s206 = sand.u32 %s43, 1
        %s207 = smul.addr %s206, 128
        %s208 = scalar_lea.vmem [#allocation2], %s207
        %p209 = pneg %p56
        %p210 = pneg %p53
        %p211 = pneg %p77
        %p212 = pneg %p74
        %p213 = pneg %p98
        %p214 = pneg %p95
        %p215 = pneg %p126
        %p216 = pneg %p123
        %s217 = sand.u32 %s113, 1
        %s218 = scalar_lea.sflag [#allocation4], %s217
        %s219 = sand.u32 %s113, 1
        %s220 = smul.addr %s219, 512
        %s221 = scalar_lea.vmem [#allocation7], %s220
        %s222 = smul.u32 4, %s26
        %s223 = smul.u32 64, %s26
        %v224 = vld [vmem:[%s195] sm:$0xff]
        %v225 = vld [vmem:[%s195 + $0x8] sm:$0xff]
        %v226 = vld [vmem:[%s195 + $0x10] sm:$0xff]
        %v227 = vld [vmem:[%s195 + $0x18] sm:$0xff]
        %v228 = vld [vmem:[%s195 + $0x20] sm:$0xff]
        %v229 = vld [vmem:[%s195 + $0x28] sm:$0xff]
        %v230 = vld [vmem:[%s195 + $0x30] sm:$0xff]
        %v231 = vld [vmem:[%s195 + $0x38] sm:$0xff]
        %v232 = vld [vmem:[%s195 + $0x40] sm:$0xff]
        %v233 = vld [vmem:[%s195 + $0x48] sm:$0xff]
        %v234 = vld [vmem:[%s195 + $0x50] sm:$0xff]
        %v235 = vld [vmem:[%s195 + $0x58] sm:$0xff]
        %v236 = vld [vmem:[%s195 + $0x60] sm:$0xff]
        %v237 = vld [vmem:[%s195 + $0x68] sm:$0xff]
        %v238 = vld [vmem:[%s195 + $0x70] sm:$0xff]
        %v239 = vld [vmem:[%s195 + $0x78] sm:$0xff]
        %v240 = vld [vmem:[#allocation5] sm:$0xff]
        %v241 = vld [vmem:[#allocation5 + $0x8] sm:$0xff]
        %v242 = vld [vmem:[#allocation5 + $0x10] sm:$0xff]
        %v243 = vld [vmem:[#allocation5 + $0x18] sm:$0xff]
        %v244 = vld [vmem:[%s2] sm:$0x1]
        %v246 = vlaneseq
        %v247 = vshrl.u32 %v246, 7
        %v248 = vsub.s32 0, %v247
        %v249 = vrot.slane %v244, %v248
        %251 = vxpose.xlu0.b32.start [1/16] %v224, 128
        %252 = vxpose.xlu0.b32.cont [2/16] %v228, 128
        %253 = vxpose.xlu0.b32.cont [3/16] %v232, 128
        %254 = vxpose.xlu0.b32.cont [4/16] %v236, 128
        %255 = vxpose.xlu0.b32.cont [5/16] 0.0, 128
        %256 = vxpose.xlu0.b32.cont [6/16] 0.0, 128
        %257 = vxpose.xlu0.b32.cont [7/16] 0.0, 128
        %258 = vxpose.xlu0.b32.cont [8/16] 0.0, 128
        %259 = vxpose.xlu0.b32.cont [9/16] 0.0, 128
        %260 = vxpose.xlu0.b32.cont [10/16] 0.0, 128
        %261 = vxpose.xlu0.b32.cont [11/16] 0.0, 128
        %262 = vxpose.xlu0.b32.cont [12/16] 0.0, 128
        %263 = vxpose.xlu0.b32.cont [13/16] 0.0, 128
        %264 = vxpose.xlu0.b32.cont [14/16] 0.0, 128
        %265 = vxpose.xlu0.b32.cont [15/16] 0.0, 128
        %266 = vxpose.xlu0.b32.end [16/16] 0.0, 128
        %v267 = vpop.trf.xlu0
        %v268 = vpop.trf.xlu0
        %v269 = vpop.trf.xlu0
        %v270 = vpop.trf.xlu0
        %v271 = vpop.trf.xlu0
        %v272 = vpop.trf.xlu0
        %v273 = vpop.trf.xlu0
        %v274 = vpop.trf.xlu0
        %v275 = vpop.trf.xlu0
        %v276 = vpop.trf.xlu0
        %v277 = vpop.trf.xlu0
        %v278 = vpop.trf.xlu0
        %v279 = vpop.trf.xlu0
        %v280 = vpop.trf.xlu0
        %v281 = vpop.trf.xlu0
        %v282 = vpop.trf.xlu0
        %283 = vxpose.xlu0.b32.start [1/16] %v225, 128
        %284 = vxpose.xlu0.b32.cont [2/16] %v229, 128
        %285 = vxpose.xlu0.b32.cont [3/16] %v233, 128
        %286 = vxpose.xlu0.b32.cont [4/16] %v237, 128
        %287 = vxpose.xlu0.b32.cont [5/16] 0.0, 128
        %288 = vxpose.xlu0.b32.cont [6/16] 0.0, 128
        %289 = vxpose.xlu0.b32.cont [7/16] 0.0, 128
        %290 = vxpose.xlu0.b32.cont [8/16] 0.0, 128
        %291 = vxpose.xlu0.b32.cont [9/16] 0.0, 128
        %292 = vxpose.xlu0.b32.cont [10/16] 0.0, 128
        %293 = vxpose.xlu0.b32.cont [11/16] 0.0, 128
        %294 = vxpose.xlu0.b32.cont [12/16] 0.0, 128
        %295 = vxpose.xlu0.b32.cont [13/16] 0.0, 128
        %296 = vxpose.xlu0.b32.cont [14/16] 0.0, 128
        %297 = vxpose.xlu0.b32.cont [15/16] 0.0, 128
        %298 = vxpose.xlu0.b32.end [16/16] 0.0, 128
        %v299 = vpop.trf.xlu0
        %v300 = vpop.trf.xlu0
        %v301 = vpop.trf.xlu0
        %v302 = vpop.trf.xlu0
        %v303 = vpop.trf.xlu0
        %v304 = vpop.trf.xlu0
        %v305 = vpop.trf.xlu0
        %v306 = vpop.trf.xlu0
        %v307 = vpop.trf.xlu0
        %v308 = vpop.trf.xlu0
        %v309 = vpop.trf.xlu0
        %v310 = vpop.trf.xlu0
        %v311 = vpop.trf.xlu0
        %v312 = vpop.trf.xlu0
        %v313 = vpop.trf.xlu0
        %v314 = vpop.trf.xlu0
        %315 = vxpose.xlu0.b32.start [1/16] %v226, 128
        %316 = vxpose.xlu0.b32.cont [2/16] %v230, 128
        %317 = vxpose.xlu0.b32.cont [3/16] %v234, 128
        %318 = vxpose.xlu0.b32.cont [4/16] %v238, 128
        %319 = vxpose.xlu0.b32.cont [5/16] 0.0, 128
        %320 = vxpose.xlu0.b32.cont [6/16] 0.0, 128
        %321 = vxpose.xlu0.b32.cont [7/16] 0.0, 128
        %322 = vxpose.xlu0.b32.cont [8/16] 0.0, 128
        %323 = vxpose.xlu0.b32.cont [9/16] 0.0, 128
        %324 = vxpose.xlu0.b32.cont [10/16] 0.0, 128
        %325 = vxpose.xlu0.b32.cont [11/16] 0.0, 128
        %326 = vxpose.xlu0.b32.cont [12/16] 0.0, 128
        %327 = vxpose.xlu0.b32.cont [13/16] 0.0, 128
        %328 = vxpose.xlu0.b32.cont [14/16] 0.0, 128
        %329 = vxpose.xlu0.b32.cont [15/16] 0.0, 128
        %330 = vxpose.xlu0.b32.end [16/16] 0.0, 128
        %v331 = vpop.trf.xlu0
        %v332 = vpop.trf.xlu0
        %v333 = vpop.trf.xlu0
        %v334 = vpop.trf.xlu0
        %v335 = vpop.trf.xlu0
        %v336 = vpop.trf.xlu0
        %v337 = vpop.trf.xlu0
        %v338 = vpop.trf.xlu0
        %v339 = vpop.trf.xlu0
        %v340 = vpop.trf.xlu0
        %v341 = vpop.trf.xlu0
        %v342 = vpop.trf.xlu0
        %v343 = vpop.trf.xlu0
        %v344 = vpop.trf.xlu0
        %v345 = vpop.trf.xlu0
        %v346 = vpop.trf.xlu0
        %347 = vxpose.xlu0.b32.start [1/16] %v227, 128
        %348 = vxpose.xlu0.b32.cont [2/16] %v231, 128
        %349 = vxpose.xlu0.b32.cont [3/16] %v235, 128
        %350 = vxpose.xlu0.b32.cont [4/16] %v239, 128
        %351 = vxpose.xlu0.b32.cont [5/16] 0.0, 128
        %352 = vxpose.xlu0.b32.cont [6/16] 0.0, 128
        %353 = vxpose.xlu0.b32.cont [7/16] 0.0, 128
        %354 = vxpose.xlu0.b32.cont [8/16] 0.0, 128
        %355 = vxpose.xlu0.b32.cont [9/16] 0.0, 128
        %356 = vxpose.xlu0.b32.cont [10/16] 0.0, 128
        %357 = vxpose.xlu0.b32.cont [11/16] 0.0, 128
        %358 = vxpose.xlu0.b32.cont [12/16] 0.0, 128
        %359 = vxpose.xlu0.b32.cont [13/16] 0.0, 128
        %360 = vxpose.xlu0.b32.cont [14/16] 0.0, 128
        %361 = vxpose.xlu0.b32.cont [15/16] 0.0, 128
        %362 = vxpose.xlu0.b32.end [16/16] 0.0, 128
        %v363 = vpop.trf.xlu0
        %v364 = vpop.trf.xlu0
        %v365 = vpop.trf.xlu0
        %v366 = vpop.trf.xlu0
        %v367 = vpop.trf.xlu0
        %v368 = vpop.trf.xlu0
        %v369 = vpop.trf.xlu0
        %v370 = vpop.trf.xlu0
        %v371 = vpop.trf.xlu0
        %v372 = vpop.trf.xlu0
        %v373 = vpop.trf.xlu0
        %v374 = vpop.trf.xlu0
        %v375 = vpop.trf.xlu0
        %v376 = vpop.trf.xlu0
        %v377 = vpop.trf.xlu0
        %v378 = vpop.trf.xlu0
        %vm379 = vcmask 261120
        %v381 = vsel %vm379, %v267, 0
        %v384 = vsel %vm379, %v268, 0
        %v387 = vsel %vm379, %v269, 0
        %v390 = vsel %vm379, %v270, 0
        %v393 = vsel %vm379, %v271, 0
        %v396 = vsel %vm379, %v272, 0
        %v399 = vsel %vm379, %v273, 0
        %v402 = vsel %vm379, %v274, 0
        %v405 = vsel %vm379, %v275, 0
        %v408 = vsel %vm379, %v276, 0
        %v411 = vsel %vm379, %v277, 0
        %v414 = vsel %vm379, %v278, 0
        %v417 = vsel %vm379, %v279, 0
        %v420 = vsel %vm379, %v280, 0
        %v423 = vsel %vm379, %v281, 0
        %v426 = vsel %vm379, %v282, 0
        %v429 = vsel %vm379, %v299, 0
        %v432 = vsel %vm379, %v300, 0
        %v435 = vsel %vm379, %v301, 0
        %v438 = vsel %vm379, %v302, 0
        %v441 = vsel %vm379, %v303, 0
        %v444 = vsel %vm379, %v304, 0
        %v447 = vsel %vm379, %v305, 0
        %v450 = vsel %vm379, %v306, 0
        %v453 = vsel %vm379, %v307, 0
        %v456 = vsel %vm379, %v308, 0
        %v459 = vsel %vm379, %v309, 0
        %v462 = vsel %vm379, %v310, 0
        %v465 = vsel %vm379, %v311, 0
        %v468 = vsel %vm379, %v312, 0
        %v471 = vsel %vm379, %v313, 0
        %v474 = vsel %vm379, %v314, 0
        %v477 = vsel %vm379, %v331, 0
        %v480 = vsel %vm379, %v332, 0
        %v483 = vsel %vm379, %v333, 0
        %v486 = vsel %vm379, %v334, 0
        %v489 = vsel %vm379, %v335, 0
        %v492 = vsel %vm379, %v336, 0
        %v495 = vsel %vm379, %v337, 0
        %v498 = vsel %vm379, %v338, 0
        %v501 = vsel %vm379, %v339, 0
        %v504 = vsel %vm379, %v340, 0
        %v507 = vsel %vm379, %v341, 0
        %v510 = vsel %vm379, %v342, 0
        %v513 = vsel %vm379, %v343, 0
        %v516 = vsel %vm379, %v344, 0
        %v519 = vsel %vm379, %v345, 0
        %v522 = vsel %vm379, %v346, 0
        %v525 = vsel %vm379, %v363, 0
        %v528 = vsel %vm379, %v364, 0
        %v531 = vsel %vm379, %v365, 0
        %v534 = vsel %vm379, %v366, 0
        %v537 = vsel %vm379, %v367, 0
        %v540 = vsel %vm379, %v368, 0
        %v543 = vsel %vm379, %v369, 0
        %v546 = vsel %vm379, %v370, 0
        %v549 = vsel %vm379, %v371, 0
        %v552 = vsel %vm379, %v372, 0
        %v555 = vsel %vm379, %v373, 0
        %v558 = vsel %vm379, %v374, 0
        %v561 = vsel %vm379, %v375, 0
        %v564 = vsel %vm379, %v376, 0
        %v567 = vsel %vm379, %v377, 0
        %v570 = vsel %vm379, %v378, 0
        %572 = vmatprep.subr.mxu0 0.0
        %573 = vmatpush1.msra.mxu0 %v240
        %574 = vmatprep.subr.mxu0 0.0
        %575 = vmatpush1.msra.mxu0 %v241
        %576 = vmatprep.subr.mxu0 0.0
        %577 = vmatpush1.msra.mxu0 %v242
        %578 = vmatprep.subr.mxu0 0.0
        %579 = vmatpush1.msra.mxu0 %v243
        %580 = vmatprep.subr.mxu0 0.0
        %581 = vmatpush1.msra.mxu0 0.0
        %582 = vmatprep.subr.mxu0 0.0
        %583 = vmatpush1.msra.mxu0 0.0
        %584 = vmatprep.subr.mxu0 0.0
        %585 = vmatpush1.msra.mxu0 0.0
        %586 = vmatprep.subr.mxu0 0.0
        %587 = vmatpush1.msra.mxu0 0.0
        %588 = vmatprep.subr.mxu0 0.0
        %589 = vmatpush1.msra.mxu0 0.0
        %590 = vmatprep.subr.mxu0 0.0
        %591 = vmatpush1.msra.mxu0 0.0
        %592 = vmatprep.subr.mxu0 0.0
        %593 = vmatpush1.msra.mxu0 0.0
        %594 = vmatprep.subr.mxu0 0.0
        %595 = vmatpush1.msra.mxu0 0.0
        %596 = vmatprep.subr.mxu0 0.0
        %597 = vmatpush1.msra.mxu0 0.0
        %598 = vmatprep.subr.mxu0 0.0
        %599 = vmatpush1.msra.mxu0 0.0
        %600 = vmatprep.subr.mxu0 0.0
        %601 = vmatpush1.msra.mxu0 0.0
        %602 = vmatprep.subr.mxu0 0.0
        %603 = vmatpush1.msra.mxu0 0.0
        %604 = vmatprep.subr.mxu0 0.0
        %605 = vmatpush1.msra.mxu0 0.0
        %606 = vmatprep.subr.mxu0 0.0
        %607 = vmatpush1.msra.mxu0 0.0
        %608 = vmatprep.subr.mxu0 0.0
        %609 = vmatpush1.msra.mxu0 0.0
        %610 = vmatprep.subr.mxu0 0.0
        %611 = vmatpush1.msra.mxu0 0.0
        %612 = vmatprep.subr.mxu0 0.0
        %613 = vmatpush1.msra.mxu0 0.0
        %614 = vmatprep.subr.mxu0 0.0
        %615 = vmatpush1.msra.mxu0 0.0
        %616 = vmatprep.subr.mxu0 0.0
        %617 = vmatpush1.msra.mxu0 0.0
        %618 = vmatprep.subr.mxu0 0.0
        %619 = vmatpush1.msra.mxu0 0.0
        %620 = vmatprep.subr.mxu0 0.0
        %621 = vmatpush1.msra.mxu0 0.0
        %622 = vmatprep.subr.mxu0 0.0
        %623 = vmatpush1.msra.mxu0 0.0
        %624 = vmatprep.subr.mxu0 0.0
        %625 = vmatpush1.msra.mxu0 0.0
        %626 = vmatprep.subr.mxu0 0.0
        %627 = vmatpush1.msra.mxu0 0.0
        %628 = vmatprep.subr.mxu0 0.0
        %629 = vmatpush1.msra.mxu0 0.0
        %630 = vmatprep.subr.mxu0 0.0
        %631 = vmatpush1.msra.mxu0 0.0
        %632 = vmatprep.subr.mxu0 0.0
        %633 = vmatpush1.msra.mxu0 0.0
        %634 = vmatprep.subr.mxu0 0.0
        %635 = vmatpush1.msra.mxu0 0.0
        %636 = vmatprep.mubr.f32.mxu0 0.0
        %637 = vmatmul.mubr.f32.gmra.mrb[0].mxu0 %v381
        %v638 = vpop.f32.mrb[0].mxu0
        %v639 = vadd.f32 %v249, %v638
        %v640 = vpop.f32.mrb[0].mxu0
        %641 = vmatprep.mubr.f32.mxu0 0.0
        %642 = vmatmul.mubr.f32.gmra.mrb[0].mxu0 %v384
        %v643 = vpop.f32.mrb[0].mxu0
        %v644 = vadd.f32 %v249, %v643
        %v645 = vpop.f32.mrb[0].mxu0
        %646 = vmatprep.mubr.f32.mxu0 0.0
        %647 = vmatmul.mubr.f32.gmra.mrb[0].mxu0 %v387
        %v648 = vpop.f32.mrb[0].mxu0
        %v649 = vadd.f32 %v249, %v648
        %v650 = vpop.f32.mrb[0].mxu0
        %651 = vmatprep.mubr.f32.mxu0 0.0
        %652 = vmatmul.mubr.f32.gmra.mrb[0].mxu0 %v390
        %v653 = vpop.f32.mrb[0].mxu0
        %v654 = vadd.f32 %v249, %v653
        %v655 = vpop.f32.mrb[0].mxu0
        %656 = vmatprep.mubr.f32.mxu0 0.0
        %657 = vmatmul.mubr.f32.gmra.mrb[0].mxu0 %v393
        %v658 = vpop.f32.mrb[0].mxu0
        %v659 = vadd.f32 %v249, %v658
        %v660 = vpop.f32.mrb[0].mxu0
        %661 = vmatprep.mubr.f32.mxu0 0.0
        %662 = vmatmul.mubr.f32.gmra.mrb[0].mxu0 %v396
        %v663 = vpop.f32.mrb[0].mxu0
        %v664 = vadd.f32 %v249, %v663
        %v665 = vpop.f32.mrb[0].mxu0
        %666 = vmatprep.mubr.f32.mxu0 0.0
        %667 = vmatmul.mubr.f32.gmra.mrb[0].mxu0 %v399
        %v668 = vpop.f32.mrb[0].mxu0
        %v669 = vadd.f32 %v249, %v668
        %v670 = vpop.f32.mrb[0].mxu0
        %671 = vmatprep.mubr.f32.mxu0 0.0
        %672 = vmatmul.mubr.f32.gmra.mrb[0].mxu0 %v402
        %v673 = vpop.f32.mrb[0].mxu0
        %v674 = vadd.f32 %v249, %v673
        %v675 = vpop.f32.mrb[0].mxu0
        %676 = vmatprep.mubr.f32.mxu0 0.0
        %677 = vmatmul.mubr.f32.gmra.mrb[0].mxu0 %v405
        %v678 = vpop.f32.mrb[0].mxu0
        %v679 = vadd.f32 %v249, %v678
        %v680 = vpop.f32.mrb[0].mxu0
        %681 = vmatprep.mubr.f32.mxu0 0.0
        %682 = vmatmul.mubr.f32.gmra.mrb[0].mxu0 %v408
        %v683 = vpop.f32.mrb[0].mxu0
        %v684 = vadd.f32 %v249, %v683
        %v685 = vpop.f32.mrb[0].mxu0
        %686 = vmatprep.mubr.f32.mxu0 0.0
        %687 = vmatmul.mubr.f32.gmra.mrb[0].mxu0 %v411
        %v688 = vpop.f32.mrb[0].mxu0
        %v689 = vadd.f32 %v249, %v688
        %v690 = vpop.f32.mrb[0].mxu0
        %691 = vmatprep.mubr.f32.mxu0 0.0
        %692 = vmatmul.mubr.f32.gmra.mrb[0].mxu0 %v414
        %v693 = vpop.f32.mrb[0].mxu0
        %v694 = vadd.f32 %v249, %v693
        %v695 = vpop.f32.mrb[0].mxu0
        %696 = vmatprep.mubr.f32.mxu0 0.0
        %697 = vmatmul.mubr.f32.gmra.mrb[0].mxu0 %v417
        %v698 = vpop.f32.mrb[0].mxu0
        %v699 = vadd.f32 %v249, %v698
        %v700 = vpop.f32.mrb[0].mxu0
        %701 = vmatprep.mubr.f32.mxu0 0.0
        %702 = vmatmul.mubr.f32.gmra.mrb[0].mxu0 %v420
        %v703 = vpop.f32.mrb[0].mxu0
        %v704 = vadd.f32 %v249, %v703
        %v705 = vpop.f32.mrb[0].mxu0
        %706 = vmatprep.mubr.f32.mxu0 0.0
        %707 = vmatmul.mubr.f32.gmra.mrb[0].mxu0 %v423
        %v708 = vpop.f32.mrb[0].mxu0
        %v709 = vadd.f32 %v249, %v708
        %v710 = vpop.f32.mrb[0].mxu0
        %711 = vmatprep.mubr.f32.mxu0 0.0
        %712 = vmatmul.mubr.f32.gmra.mrb[0].mxu0 %v426
        %v713 = vpop.f32.mrb[0].mxu0
        %v714 = vadd.f32 %v249, %v713
        %v715 = vpop.f32.mrb[0].mxu0
        %716 = vmatprep.mubr.f32.mxu0 0.0
        %717 = vmatmul.mubr.f32.gmra.mrb[0].mxu0 %v429
        %v718 = vpop.f32.mrb[0].mxu0
        %v719 = vadd.f32 %v249, %v718
        %v720 = vpop.f32.mrb[0].mxu0
        %721 = vmatprep.mubr.f32.mxu0 0.0
        %722 = vmatmul.mubr.f32.gmra.mrb[0].mxu0 %v432
        %v723 = vpop.f32.mrb[0].mxu0
        %v724 = vadd.f32 %v249, %v723
        %v725 = vpop.f32.mrb[0].mxu0
        %726 = vmatprep.mubr.f32.mxu0 0.0
        %727 = vmatmul.mubr.f32.gmra.mrb[0].mxu0 %v435
        %v728 = vpop.f32.mrb[0].mxu0
        %v729 = vadd.f32 %v249, %v728
        %v730 = vpop.f32.mrb[0].mxu0
        %731 = vmatprep.mubr.f32.mxu0 0.0
        %732 = vmatmul.mubr.f32.gmra.mrb[0].mxu0 %v438
        %v733 = vpop.f32.mrb[0].mxu0
        %v734 = vadd.f32 %v249, %v733
        %v735 = vpop.f32.mrb[0].mxu0
        %736 = vmatprep.mubr.f32.mxu0 0.0
        %737 = vmatmul.mubr.f32.gmra.mrb[0].mxu0 %v441
        %v738 = vpop.f32.mrb[0].mxu0
        %v739 = vadd.f32 %v249, %v738
        %v740 = vpop.f32.mrb[0].mxu0
        %741 = vmatprep.mubr.f32.mxu0 0.0
        %742 = vmatmul.mubr.f32.gmra.mrb[0].mxu0 %v444
        %v743 = vpop.f32.mrb[0].mxu0
        %v744 = vadd.f32 %v249, %v743
        %v745 = vpop.f32.mrb[0].mxu0
        %746 = vmatprep.mubr.f32.mxu0 0.0
        %747 = vmatmul.mubr.f32.gmra.mrb[0].mxu0 %v447
        %v748 = vpop.f32.mrb[0].mxu0
        %v749 = vadd.f32 %v249, %v748
        %v750 = vpop.f32.mrb[0].mxu0
        %751 = vmatprep.mubr.f32.mxu0 0.0
        %752 = vmatmul.mubr.f32.gmra.mrb[0].mxu0 %v450
        %v753 = vpop.f32.mrb[0].mxu0
        %v754 = vadd.f32 %v249, %v753
        %v755 = vpop.f32.mrb[0].mxu0
        %756 = vmatprep.mubr.f32.mxu0 0.0
        %757 = vmatmul.mubr.f32.gmra.mrb[0].mxu0 %v453
        %v758 = vpop.f32.mrb[0].mxu0
        %v759 = vadd.f32 %v249, %v758
        %v760 = vpop.f32.mrb[0].mxu0
        %761 = vmatprep.mubr.f32.mxu0 0.0
        %762 = vmatmul.mubr.f32.gmra.mrb[0].mxu0 %v456
        %v763 = vpop.f32.mrb[0].mxu0
        %v764 = vadd.f32 %v249, %v763
        %v765 = vpop.f32.mrb[0].mxu0
        %766 = vmatprep.mubr.f32.mxu0 0.0
        %767 = vmatmul.mubr.f32.gmra.mrb[0].mxu0 %v459
        %v768 = vpop.f32.mrb[0].mxu0
        %v769 = vadd.f32 %v249, %v768
        %v770 = vpop.f32.mrb[0].mxu0
        %771 = vmatprep.mubr.f32.mxu0 0.0
        %772 = vmatmul.mubr.f32.gmra.mrb[0].mxu0 %v462
        %v773 = vpop.f32.mrb[0].mxu0
        %v774 = vadd.f32 %v249, %v773
        %v775 = vpop.f32.mrb[0].mxu0
        %776 = vmatprep.mubr.f32.mxu0 0.0
        %777 = vmatmul.mubr.f32.gmra.mrb[0].mxu0 %v465
        %v778 = vpop.f32.mrb[0].mxu0
        %v779 = vadd.f32 %v249, %v778
        %v780 = vpop.f32.mrb[0].mxu0
        %781 = vmatprep.mubr.f32.mxu0 0.0
        %782 = vmatmul.mubr.f32.gmra.mrb[0].mxu0 %v468
        %v783 = vpop.f32.mrb[0].mxu0
        %v784 = vadd.f32 %v249, %v783
        %v785 = vpop.f32.mrb[0].mxu0
        %786 = vmatprep.mubr.f32.mxu0 0.0
        %787 = vmatmul.mubr.f32.gmra.mrb[0].mxu0 %v471
        %v788 = vpop.f32.mrb[0].mxu0
        %v789 = vadd.f32 %v249, %v788
        %v790 = vpop.f32.mrb[0].mxu0
        %791 = vmatprep.mubr.f32.mxu0 0.0
        %792 = vmatmul.mubr.f32.gmra.mrb[0].mxu0 %v474
        %v793 = vpop.f32.mrb[0].mxu0
        %v794 = vadd.f32 %v249, %v793
        %v795 = vpop.f32.mrb[0].mxu0
        %796 = vmatprep.mubr.f32.mxu0 0.0
        %797 = vmatmul.mubr.f32.gmra.mrb[0].mxu0 %v477
        %v798 = vpop.f32.mrb[0].mxu0
        %v799 = vadd.f32 %v249, %v798
        %v800 = vpop.f32.mrb[0].mxu0
        %801 = vmatprep.mubr.f32.mxu0 0.0
        %802 = vmatmul.mubr.f32.gmra.mrb[0].mxu0 %v480
        %v803 = vpop.f32.mrb[0].mxu0
        %v804 = vadd.f32 %v249, %v803
        %v805 = vpop.f32.mrb[0].mxu0
        %806 = vmatprep.mubr.f32.mxu0 0.0
        %807 = vmatmul.mubr.f32.gmra.mrb[0].mxu0 %v483
        %v808 = vpop.f32.mrb[0].mxu0
        %v809 = vadd.f32 %v249, %v808
        %v810 = vpop.f32.mrb[0].mxu0
        %811 = vmatprep.mubr.f32.mxu0 0.0
        %812 = vmatmul.mubr.f32.gmra.mrb[0].mxu0 %v486
        %v813 = vpop.f32.mrb[0].mxu0
        %v814 = vadd.f32 %v249, %v813
        %v815 = vpop.f32.mrb[0].mxu0
        %816 = vmatprep.mubr.f32.mxu0 0.0
        %817 = vmatmul.mubr.f32.gmra.mrb[0].mxu0 %v489
        %v818 = vpop.f32.mrb[0].mxu0
        %v819 = vadd.f32 %v249, %v818
        %v820 = vpop.f32.mrb[0].mxu0
        %821 = vmatprep.mubr.f32.mxu0 0.0
        %822 = vmatmul.mubr.f32.gmra.mrb[0].mxu0 %v492
        %v823 = vpop.f32.mrb[0].mxu0
        %v824 = vadd.f32 %v249, %v823
        %v825 = vpop.f32.mrb[0].mxu0
        %826 = vmatprep.mubr.f32.mxu0 0.0
        %827 = vmatmul.mubr.f32.gmra.mrb[0].mxu0 %v495
        %v828 = vpop.f32.mrb[0].mxu0
        %v829 = vadd.f32 %v249, %v828
        %v830 = vpop.f32.mrb[0].mxu0
        %831 = vmatprep.mubr.f32.mxu0 0.0
        %832 = vmatmul.mubr.f32.gmra.mrb[0].mxu0 %v498
        %v833 = vpop.f32.mrb[0].mxu0
        %v834 = vadd.f32 %v249, %v833
        %v835 = vpop.f32.mrb[0].mxu0
        %836 = vmatprep.mubr.f32.mxu0 0.0
        %837 = vmatmul.mubr.f32.gmra.mrb[0].mxu0 %v501
        %v838 = vpop.f32.mrb[0].mxu0
        %v839 = vadd.f32 %v249, %v838
        %v840 = vpop.f32.mrb[0].mxu0
        %841 = vmatprep.mubr.f32.mxu0 0.0
        %842 = vmatmul.mubr.f32.gmra.mrb[0].mxu0 %v504
        %v843 = vpop.f32.mrb[0].mxu0
        %v844 = vadd.f32 %v249, %v843
        %v845 = vpop.f32.mrb[0].mxu0
        %846 = vmatprep.mubr.f32.mxu0 0.0
        %847 = vmatmul.mubr.f32.gmra.mrb[0].mxu0 %v507
        %v848 = vpop.f32.mrb[0].mxu0
        %v849 = vadd.f32 %v249, %v848
        %v850 = vpop.f32.mrb[0].mxu0
        %851 = vmatprep.mubr.f32.mxu0 0.0
        %852 = vmatmul.mubr.f32.gmra.mrb[0].mxu0 %v510
        %v853 = vpop.f32.mrb[0].mxu0
        %v854 = vadd.f32 %v249, %v853
        %v855 = vpop.f32.mrb[0].mxu0
        %856 = vmatprep.mubr.f32.mxu0 0.0
        %857 = vmatmul.mubr.f32.gmra.mrb[0].mxu0 %v513
        %v858 = vpop.f32.mrb[0].mxu0
        %v859 = vadd.f32 %v249, %v858
        %v860 = vpop.f32.mrb[0].mxu0
        %861 = vmatprep.mubr.f32.mxu0 0.0
        %862 = vmatmul.mubr.f32.gmra.mrb[0].mxu0 %v516
        %v863 = vpop.f32.mrb[0].mxu0
        %v864 = vadd.f32 %v249, %v863
        %v865 = vpop.f32.mrb[0].mxu0
        %866 = vmatprep.mubr.f32.mxu0 0.0
        %867 = vmatmul.mubr.f32.gmra.mrb[0].mxu0 %v519
        %v868 = vpop.f32.mrb[0].mxu0
        %v869 = vadd.f32 %v249, %v868
        %v870 = vpop.f32.mrb[0].mxu0
        %871 = vmatprep.mubr.f32.mxu0 0.0
        %872 = vmatmul.mubr.f32.gmra.mrb[0].mxu0 %v522
        %v873 = vpop.f32.mrb[0].mxu0
        %v874 = vadd.f32 %v249, %v873
        %v875 = vpop.f32.mrb[0].mxu0
        %876 = vmatprep.mubr.f32.mxu0 0.0
        %877 = vmatmul.mubr.f32.gmra.mrb[0].mxu0 %v525
        %v878 = vpop.f32.mrb[0].mxu0
        %v879 = vadd.f32 %v249, %v878
        %v880 = vpop.f32.mrb[0].mxu0
        %881 = vmatprep.mubr.f32.mxu0 0.0
        %882 = vmatmul.mubr.f32.gmra.mrb[0].mxu0 %v528
        %v883 = vpop.f32.mrb[0].mxu0
        %v884 = vadd.f32 %v249, %v883
        %v885 = vpop.f32.mrb[0].mxu0
        %886 = vmatprep.mubr.f32.mxu0 0.0
        %887 = vmatmul.mubr.f32.gmra.mrb[0].mxu0 %v531
        %v888 = vpop.f32.mrb[0].mxu0
        %v889 = vadd.f32 %v249, %v888
        %v890 = vpop.f32.mrb[0].mxu0
        %891 = vmatprep.mubr.f32.mxu0 0.0
        %892 = vmatmul.mubr.f32.gmra.mrb[0].mxu0 %v534
        %v893 = vpop.f32.mrb[0].mxu0
        %v894 = vadd.f32 %v249, %v893
        %v895 = vpop.f32.mrb[0].mxu0
        %896 = vmatprep.mubr.f32.mxu0 0.0
        %897 = vmatmul.mubr.f32.gmra.mrb[0].mxu0 %v537
        %v898 = vpop.f32.mrb[0].mxu0
        %v899 = vadd.f32 %v249, %v898
        %v900 = vpop.f32.mrb[0].mxu0
        %901 = vmatprep.mubr.f32.mxu0 0.0
        %902 = vmatmul.mubr.f32.gmra.mrb[0].mxu0 %v540
        %v903 = vpop.f32.mrb[0].mxu0
        %v904 = vadd.f32 %v249, %v903
        %v905 = vpop.f32.mrb[0].mxu0
        %906 = vmatprep.mubr.f32.mxu0 0.0
        %907 = vmatmul.mubr.f32.gmra.mrb[0].mxu0 %v543
        %v908 = vpop.f32.mrb[0].mxu0
        %v909 = vadd.f32 %v249, %v908
        %v910 = vpop.f32.mrb[0].mxu0
        %911 = vmatprep.mubr.f32.mxu0 0.0
        %912 = vmatmul.mubr.f32.gmra.mrb[0].mxu0 %v546
        %v913 = vpop.f32.mrb[0].mxu0
        %v914 = vadd.f32 %v249, %v913
        %v915 = vpop.f32.mrb[0].mxu0
        %916 = vmatprep.mubr.f32.mxu0 0.0
        %917 = vmatmul.mubr.f32.gmra.mrb[0].mxu0 %v549
        %v918 = vpop.f32.mrb[0].mxu0
        %v919 = vadd.f32 %v249, %v918
        %v920 = vpop.f32.mrb[0].mxu0
        %921 = vmatprep.mubr.f32.mxu0 0.0
        %922 = vmatmul.mubr.f32.gmra.mrb[0].mxu0 %v552
        %v923 = vpop.f32.mrb[0].mxu0
        %v924 = vadd.f32 %v249, %v923
        %v925 = vpop.f32.mrb[0].mxu0
        %926 = vmatprep.mubr.f32.mxu0 0.0
        %927 = vmatmul.mubr.f32.gmra.mrb[0].mxu0 %v555
        %v928 = vpop.f32.mrb[0].mxu0
        %v929 = vadd.f32 %v249, %v928
        %v930 = vpop.f32.mrb[0].mxu0
        %931 = vmatprep.mubr.f32.mxu0 0.0
        %932 = vmatmul.mubr.f32.gmra.mrb[0].mxu0 %v558
        %v933 = vpop.f32.mrb[0].mxu0
        %v934 = vadd.f32 %v249, %v933
        %v935 = vpop.f32.mrb[0].mxu0
        %936 = vmatprep.mubr.f32.mxu0 0.0
        %937 = vmatmul.mubr.f32.gmra.mrb[0].mxu0 %v561
        %v938 = vpop.f32.mrb[0].mxu0
        %v939 = vadd.f32 %v249, %v938
        %v940 = vpop.f32.mrb[0].mxu0
        %941 = vmatprep.mubr.f32.mxu0 0.0
        %942 = vmatmul.mubr.f32.gmra.mrb[0].mxu0 %v564
        %v943 = vpop.f32.mrb[0].mxu0
        %v944 = vadd.f32 %v249, %v943
        %v945 = vpop.f32.mrb[0].mxu0
        %946 = vmatprep.mubr.f32.mxu0 0.0
        %947 = vmatmul.mubr.f32.gmra.mrb[0].mxu0 %v567
        %v948 = vpop.f32.mrb[0].mxu0
        %v949 = vadd.f32 %v249, %v948
        %v950 = vpop.f32.mrb[0].mxu0
        %951 = vmatprep.mubr.f32.mxu0 0.0
        %952 = vmatmul.mubr.f32.gmra.mrb[0].mxu0 %v570
        %v953 = vpop.f32.mrb[0].mxu0
        %v954 = vadd.f32 %v249, %v953
        %v955 = vpop.f32.mrb[0].mxu0
        %956 = vdwg.mxu0
        %957 = vst [vmem:[%s221] sm:$0xff] %v639
        %958 = vst [vmem:[%s221 + $0x8] sm:$0xff] %v644
        %959 = vst [vmem:[%s221 + $0x10] sm:$0xff] %v649
        %960 = vst [vmem:[%s221 + $0x18] sm:$0xff] %v654
        %961 = vst [vmem:[%s221 + $0x20] sm:$0xff] %v659
        %962 = vst [vmem:[%s221 + $0x28] sm:$0xff] %v664
        %963 = vst [vmem:[%s221 + $0x30] sm:$0xff] %v669
        %964 = vst [vmem:[%s221 + $0x38] sm:$0xff] %v674
        %965 = vst [vmem:[%s221 + $0x40] sm:$0xff] %v679
        %966 = vst [vmem:[%s221 + $0x48] sm:$0xff] %v684
        %967 = vst [vmem:[%s221 + $0x50] sm:$0xff] %v689
        %968 = vst [vmem:[%s221 + $0x58] sm:$0xff] %v694
        %969 = vst [vmem:[%s221 + $0x60] sm:$0xff] %v699
        %970 = vst [vmem:[%s221 + $0x68] sm:$0xff] %v704
        %971 = vst [vmem:[%s221 + $0x70] sm:$0xff] %v709
        %972 = vst [vmem:[%s221 + $0x78] sm:$0xff] %v714
        %973 = vst [vmem:[%s221 + $0x80] sm:$0xff] %v719
        %974 = vst [vmem:[%s221 + $0x88] sm:$0xff] %v724
        %975 = vst [vmem:[%s221 + $0x90] sm:$0xff] %v729
        %976 = vst [vmem:[%s221 + $0x98] sm:$0xff] %v734
        %977 = vst [vmem:[%s221 + $0xa0] sm:$0xff] %v739
        %978 = vst [vmem:[%s221 + $0xa8] sm:$0xff] %v744
        %979 = vst [vmem:[%s221 + $0xb0] sm:$0xff] %v749
        %980 = vst [vmem:[%s221 + $0xb8] sm:$0xff] %v754
        %981 = vst [vmem:[%s221 + $0xc0] sm:$0xff] %v759
        %982 = vst [vmem:[%s221 + $0xc8] sm:$0xff] %v764
        %983 = vst [vmem:[%s221 + $0xd0] sm:$0xff] %v769
        %984 = vst [vmem:[%s221 + $0xd8] sm:$0xff] %v774
        %985 = vst [vmem:[%s221 + $0xe0] sm:$0xff] %v779
        %986 = vst [vmem:[%s221 + $0xe8] sm:$0xff] %v784
        %987 = vst [vmem:[%s221 + $0xf0] sm:$0xff] %v789
        %988 = vst [vmem:[%s221 + $0xf8] sm:$0xff] %v794
        %989 = vst [vmem:[%s221 + $0x100] sm:$0xff] %v799
        %990 = vst [vmem:[%s221 + $0x108] sm:$0xff] %v804
        %991 = vst [vmem:[%s221 + $0x110] sm:$0xff] %v809
        %992 = vst [vmem:[%s221 + $0x118] sm:$0xff] %v814
        %993 = vst [vmem:[%s221 + $0x120] sm:$0xff] %v819
        %994 = vst [vmem:[%s221 + $0x128] sm:$0xff] %v824
        %995 = vst [vmem:[%s221 + $0x130] sm:$0xff] %v829
        %996 = vst [vmem:[%s221 + $0x138] sm:$0xff] %v834
        %997 = vst [vmem:[%s221 + $0x140] sm:$0xff] %v839
        %998 = vst [vmem:[%s221 + $0x148] sm:$0xff] %v844
        %999 = vst [vmem:[%s221 + $0x150] sm:$0xff] %v849
        %1000 = vst [vmem:[%s221 + $0x158] sm:$0xff] %v854
        %1001 = vst [vmem:[%s221 + $0x160] sm:$0xff] %v859
        %1002 = vst [vmem:[%s221 + $0x168] sm:$0xff] %v864
        %1003 = vst [vmem:[%s221 + $0x170] sm:$0xff] %v869
        %1004 = vst [vmem:[%s221 + $0x178] sm:$0xff] %v874
        %1005 = vst [vmem:[%s221 + $0x180] sm:$0xff] %v879
        %1006 = vst [vmem:[%s221 + $0x188] sm:$0xff] %v884
        %1007 = vst [vmem:[%s221 + $0x190] sm:$0xff] %v889
        %1008 = vst [vmem:[%s221 + $0x198] sm:$0xff] %v894
        %1009 = vst [vmem:[%s221 + $0x1a0] sm:$0xff] %v899
        %1010 = vst [vmem:[%s221 + $0x1a8] sm:$0xff] %v904
        %1011 = vst [vmem:[%s221 + $0x1b0] sm:$0xff] %v909
        %1012 = vst [vmem:[%s221 + $0x1b8] sm:$0xff] %v914
        %1013 = vst [vmem:[%s221 + $0x1c0] sm:$0xff] %v919
        %1014 = vst [vmem:[%s221 + $0x1c8] sm:$0xff] %v924
        %1015 = vst [vmem:[%s221 + $0x1d0] sm:$0xff] %v929
        %1016 = vst [vmem:[%s221 + $0x1d8] sm:$0xff] %v934
        %1017 = vst [vmem:[%s221 + $0x1e0] sm:$0xff] %v939
        %1018 = vst [vmem:[%s221 + $0x1e8] sm:$0xff] %v944
        %1019 = vst [vmem:[%s221 + $0x1f0] sm:$0xff] %v949
        %1020 = vst [vmem:[%s221 + $0x1f8] sm:$0xff] %v954
        %s1021 = sand.u32 %s113, 1
        %s1022 = scalar_lea.sflag [#allocation4], %s1021
        %s1023 = sand.u32 %s113, 1
        %s1024 = smul.addr %s1023, 512
        %s1025 = scalar_lea.vmem [#allocation7], %s1024
        // Predicated region
        $region41: #{tpu_custom_call.1} parent=31 // pred_check
          %p1026 = pneg %p123
        $region42: #{tpu_custom_call.1} parent=31 // pred_check_branch
          %1028 = sbr.rel (%p1026) target = $region44
        $region43: #{tpu_custom_call.1} parent=31 // pred_region
          %s1029 = smul.u32 64, %s26
          %s1031 = ssub.s32 8192, 8192
          %1032 = vsyncadd %s1022, %s1031
          %s1033 = smul.addr %s25, 64
          %s1034 = sadd.s32 %s1029, %s1033
          %s1035 = smul.addr %s1034, 128
          %s1036 = scalar_lea.hbm %s3, %s1035
          %s1037 = sshll.u32 %s1025, 4
          %s1038 = int_to_ptr.vmem [resolvable:$true] %s1037
          %1043 = dma.vmem_to_hbm [thread:$0]  %s1038, 8192, %s1036, %s1022, 128, 128, 8
        $region44: #{tpu_custom_call.1} parent=31 // pred_fallthru
          _
      $region32: #{tpu_custom_call.1} parent=5 // pred_fallthru
        _
      %p1044 = scmp.le.s32.totalorder 2, %s16
      // Predicated region
      $region45: #{tpu_custom_call.1} parent=5 // pred_check
        %p1045 = pneg %p1044
      $region46: #{tpu_custom_call.1} parent=5 // pred_check_branch
        %1047 = sbr.rel (%p1045) target = $region48
      $region47: #{tpu_custom_call.1} parent=5 // pred_region
        %s1048 = ssub.s32 %s16, 2
        // Predicated region
        $region49: #{tpu_custom_call.1} parent=47 // pred_check
          %p1049 = pneg %p129
        $region50: #{tpu_custom_call.1} parent=47 // pred_check_branch
          %1051 = sbr.rel (%p1049) target = $region52
        $region51: #{tpu_custom_call.1} parent=47 // pred_region
          %s1052 = sand.u32 %s114, 1
          %s1053 = scalar_lea.sflag [#allocation4], %s1052
          %s1054 = sand.u32 %s114, 1
          %s1055 = smul.addr %s1054, 512
          %s1056 = scalar_lea.vmem [#allocation7], %s1055
          %1057 = dma.done %s1053, 8192
        $region52: #{tpu_custom_call.1} parent=47 // pred_fallthru
          _
      $region48: #{tpu_custom_call.1} parent=5 // pred_fallthru
        _
    $region6: #{tpu_custom_call.1} parent=1 // loop_footer
      %s20 = sadd.s32 1, %s16
    $region7: #{tpu_custom_call.1} parent=1 // loop_footer_branch
      %15 = sbr.rel target = $region3
    $region8: #{tpu_custom_call.1} parent=1 // loop_exit
      _
    %1058 = vsyncpa [#allocation3], 1
    %s1059 = scalar_lea.sflag [#allocation3], 1
    %1060 = vsyncpa %s1059, 1
    %1061 = vsyncpa [#allocation6], 1
    %1062 = vsyncpa [#allocation4], 1
    %s1063 = scalar_lea.sflag [#allocation4], 1
    %1064 = vsyncpa %s1063, 1

</llo_original>
